<compile_context>
chip_gen: v7x
topology: tpu7x:2x2x1
jax: 0.10.0
libtpu: 0.0.40
codegen_flags: <defaults>
</compile_context>

<pallas_src>
import jax
import jax.numpy as jnp
from jax.experimental import pallas as pl
from jax.experimental.pallas import tpu as pltpu

_LANE = 128
_TILE_B_MAX = 512  # mem-bound sweet spot; tile easily fits v7x's 64 MiB VMEM


def _round_up(x, m):
    return (x + m - 1) // m * m


def critic_kernel(obs_ref, act_ref, w1o_ref, w1a_ref, b1_ref,
                  w2_ref, b2_ref, w3_ref, o_ref):
    # encoder (fused): concat(obs, act) @ W1 == obs @ W1[:OBS] + act @ W1[OBS:]
    h1 = jnp.dot(obs_ref[...], w1o_ref[...], preferred_element_type=jnp.float32)
    h1 = h1 + jnp.dot(act_ref[...], w1a_ref[...], preferred_element_type=jnp.float32)
    h1 = jnp.maximum(h1 + b1_ref[...], 0.0)
    # torso layer 2: Linear + ReLU (HID padded to 128 lanes)
    h2 = jnp.dot(h1, w2_ref[...], preferred_element_type=jnp.float32) + b2_ref[...]
    h2 = jnp.maximum(h2, 0.0)
    # value head (out_features == 1): VPU mul + cross-lane reduce (MXU stays free)
    v = jnp.sum(h2 * w3_ref[...], axis=-1)                 # (TILE_B,)
    # lane-dense store: one (1, TILE_B) row instead of (TILE_B, 1) masked stores
    o_ref[...] = v.reshape(1, -1).astype(o_ref.dtype)


@jax.jit
def critic_forward(observation, action, params):
    """Pallas-backed Critic.forward(observation, action) -> (B,) values."""
    obs = observation.astype(jnp.float32)
    act = action.astype(jnp.float32)
    B, OBS = obs.shape
    ACT = act.shape[-1]
    H = params["w2"].shape[0]
    hp = _round_up(H, _LANE) - H

    # Batch tiling: lane-aligned tile; pad the batch to a whole number of tiles.
    tile_b = min(_TILE_B_MAX, _round_up(B, _LANE))
    b_pad = _round_up(B, tile_b)
    if b_pad != B:
        obs = jnp.pad(obs, ((0, b_pad - B), (0, 0)))
        act = jnp.pad(act, ((0, b_pad - B), (0, 0)))

    # Weight packing (trace-time, one-off under jit): split W1 for the fused
    # concat; zero-pad the hidden width to 128 lanes.
    w1, b1, w2, b2, w3, b3 = (params["w1"], params["b1"], params["w2"],
                              params["b2"], params["w3"], params["b3"])
    w1o = jnp.pad(w1[:OBS], ((0, 0), (0, hp)))
    w1a = jnp.pad(w1[OBS:], ((0, 0), (0, hp)))
    b1p = jnp.pad(b1, ((0, 0), (0, hp)))
    w2p = jnp.pad(w2, ((0, hp), (0, hp)))
    b2p = jnp.pad(b2, ((0, 0), (0, hp)))
    w3r = jnp.pad(w3.reshape(1, H), ((0, 0), (0, hp)))

    def resident(arr):  # whole array, constant index_map -> stays VMEM-resident
        return pl.BlockSpec(arr.shape, lambda i: (0, 0))

    out = pl.pallas_call(
        critic_kernel,
        out_shape=jax.ShapeDtypeStruct((1, b_pad), jnp.float32),
        grid=(b_pad // tile_b,),
        in_specs=[
            pl.BlockSpec((tile_b, OBS), lambda i: (i, 0)),
            pl.BlockSpec((tile_b, ACT), lambda i: (i, 0)),
            resident(w1o), resident(w1a), resident(b1p),
            resident(w2p), resident(b2p), resident(w3r),
        ],
        out_specs=pl.BlockSpec((1, tile_b), lambda i: (0, i)),
        compiler_params=pltpu.CompilerParams(
            dimension_semantics=("parallel",)),
    )(obs, act, w1o, w1a, b1p, w2p, b2p, w3r)

    # head: ValueHead bias (single scalar) + squeeze(-1)  (glue)
    return out[0, :B] + b3.reshape(())


def init_params(key, in_size, hidden):
    """Deterministic init matching torch.nn.Linear default (U[-1/sqrt(fan_in), +])."""
    ks = jax.random.split(key, 6)

    def linear(kw, kb, fan_in, fan_out):
        bound = 1.0 / jnp.sqrt(jnp.float32(fan_in))
        w = jax.random.uniform(kw, (fan_in, fan_out), jnp.float32, -bound, bound)
        b = jax.random.uniform(kb, (1, fan_out), jnp.float32, -bound, bound)
        return w, b

    w1, b1 = linear(ks[0], ks[1], in_size, hidden)
    w2, b2 = linear(ks[2], ks[3], hidden, hidden)
    w3, b3 = linear(ks[4], ks[5], hidden, 1)
    return {"w1": w1, "b1": b1, "w2": w2, "b2": b2, "w3": w3, "b3": b3}


def critic_reference(observation, action, p):
    x = jnp.concatenate([observation, action], axis=-1).astype(jnp.float32)
    h1 = jnp.maximum(x @ p["w1"] + p["b1"], 0.0)
    h2 = jnp.maximum(h1 @ p["w2"] + p["b2"], 0.0)
    return jnp.squeeze(h2 @ p["w3"] + p["b3"], axis=-1)


if __name__ == "__main__":
    B, OBS, ACT, HIDDEN = 8, 24, 8, 32

    key = jax.random.PRNGKey(0)
    k_obs, k_act, k_par, k_obs2, k_act2 = jax.random.split(key, 5)
    observation = jax.random.normal(k_obs, (B, OBS), dtype=jnp.float32)
    action = jax.random.normal(k_act, (B, ACT), dtype=jnp.float32)
    params = init_params(k_par, OBS + ACT, HIDDEN)

    values = jax.block_until_ready(critic_forward(observation, action, params))
    ref = critic_reference(observation, action, params)
    assert values.shape == (B,)
    assert jnp.allclose(values, ref, atol=1e-4, rtol=1e-4)

    # Larger, non-tile-aligned batch: exercises the batch grid + padding path.
    B2 = 1030
    obs2 = jax.random.normal(k_obs2, (B2, OBS), dtype=jnp.float32)
    act2 = jax.random.normal(k_act2, (B2, ACT), dtype=jnp.float32)
    values2 = jax.block_until_ready(critic_forward(obs2, act2, params))
    ref2 = critic_reference(obs2, act2, params)
    assert values2.shape == (B2,)
    assert jnp.allclose(values2, ref2, atol=1e-4, rtol=1e-4)

    print("KERNEL_OK")
</pallas_src>

<mosaic_0001>
module attributes {stable_mosaic.version = 11 : i64} {
  func.func @critic_kernel(%arg0: i32, %arg1: memref<128x24xf32, #tpu.memory_space<vmem>>, %arg2: memref<128x8xf32, #tpu.memory_space<vmem>>, %arg3: memref<24x128xf32, #tpu.memory_space<vmem>>, %arg4: memref<8x128xf32, #tpu.memory_space<vmem>>, %arg5: memref<1x128xf32, #tpu.memory_space<vmem>>, %arg6: memref<128x128xf32, #tpu.memory_space<vmem>>, %arg7: memref<1x128xf32, #tpu.memory_space<vmem>>, %arg8: memref<1x128xf32, #tpu.memory_space<vmem>>, %arg9: memref<1x128xf32, #tpu.memory_space<vmem>>) attributes {dimension_semantics = [#tpu.dimension_semantics<parallel>], iteration_bounds = array<i64: 1>, scalar_prefetch = 0 : i64, scratch_operands = 0 : i64, tpu.core_type = #tpu.core_type<tc>, window_params = [{transform_indices = @transform_0, window_bounds = array<i64: 128, 24>}, {transform_indices = @transform_1, window_bounds = array<i64: 128, 8>}, {pipeline_mode = #tpu.pipeline_mode<synchronous>, transform_indices = @transform_2, window_bounds = array<i64: 24, 128>}, {pipeline_mode = #tpu.pipeline_mode<synchronous>, transform_indices = @transform_3, window_bounds = array<i64: 8, 128>}, {pipeline_mode = #tpu.pipeline_mode<synchronous>, transform_indices = @transform_4, window_bounds = array<i64: 1, 128>}, {pipeline_mode = #tpu.pipeline_mode<synchronous>, transform_indices = @transform_5, window_bounds = array<i64: 128, 128>}, {pipeline_mode = #tpu.pipeline_mode<synchronous>, transform_indices = @transform_6, window_bounds = array<i64: 1, 128>}, {pipeline_mode = #tpu.pipeline_mode<synchronous>, transform_indices = @transform_7, window_bounds = array<i64: 1, 128>}, {transform_indices = @transform_8, window_bounds = array<i64: 1, 128>}]} {
    %c0 = arith.constant 0 : index
    %c0_0 = arith.constant 0 : index
    %0 = vector.load %arg1[%c0, %c0_0] : memref<128x24xf32, #tpu.memory_space<vmem>>, vector<128x24xf32>
    %c0_1 = arith.constant 0 : index
    %c0_2 = arith.constant 0 : index
    %1 = vector.load %arg3[%c0_1, %c0_2] : memref<24x128xf32, #tpu.memory_space<vmem>>, vector<24x128xf32>
    %cst = arith.constant dense<0.000000e+00> : vector<128x128xf32>
    %2 = tpu.matmul %0, %1, %cst {dimension_numbers = #tpu.dot_dimension_numbers<[1], [0], [0], [1], [0, 0, 1, 1], [], []>} : vector<128x24xf32>, vector<24x128xf32>, vector<128x128xf32> -> vector<128x128xf32>
    %c0_3 = arith.constant 0 : index
    %c0_4 = arith.constant 0 : index
    %3 = vector.load %arg2[%c0_3, %c0_4] : memref<128x8xf32, #tpu.memory_space<vmem>>, vector<128x8xf32>
    %c0_5 = arith.constant 0 : index
    %c0_6 = arith.constant 0 : index
    %4 = vector.load %arg4[%c0_5, %c0_6] : memref<8x128xf32, #tpu.memory_space<vmem>>, vector<8x128xf32>
    %cst_7 = arith.constant dense<0.000000e+00> : vector<128x128xf32>
    %5 = tpu.matmul %3, %4, %cst_7 {dimension_numbers = #tpu.dot_dimension_numbers<[1], [0], [0], [1], [0, 0, 1, 1], [], []>} : vector<128x8xf32>, vector<8x128xf32>, vector<128x128xf32> -> vector<128x128xf32>
    %6 = arith.addf %2, %5 : vector<128x128xf32>
    %c0_8 = arith.constant 0 : index
    %c0_9 = arith.constant 0 : index
    %7 = vector.load %arg5[%c0_8, %c0_9] : memref<1x128xf32, #tpu.memory_space<vmem>>, vector<1x128xf32>
    %8 = vector.broadcast %7 : vector<1x128xf32> to vector<128x128xf32>
    %9 = arith.addf %6, %8 : vector<128x128xf32>
    %cst_10 = arith.constant 0.000000e+00 : f32
    %10 = vector.broadcast %cst_10 : f32 to vector<128x128xf32>
    %11 = arith.maximumf %9, %10 : vector<128x128xf32>
    %c0_11 = arith.constant 0 : index
    %c0_12 = arith.constant 0 : index
    %12 = vector.load %arg6[%c0_11, %c0_12] : memref<128x128xf32, #tpu.memory_space<vmem>>, vector<128x128xf32>
    %cst_13 = arith.constant dense<0.000000e+00> : vector<128x128xf32>
    %13 = tpu.matmul %11, %12, %cst_13 {dimension_numbers = #tpu.dot_dimension_numbers<[1], [0], [0], [1], [0, 0, 1, 1], [], []>} : vector<128x128xf32>, vector<128x128xf32>, vector<128x128xf32> -> vector<128x128xf32>
    %c0_14 = arith.constant 0 : index
    %c0_15 = arith.constant 0 : index
    %14 = vector.load %arg7[%c0_14, %c0_15] : memref<1x128xf32, #tpu.memory_space<vmem>>, vector<1x128xf32>
    %15 = vector.broadcast %14 : vector<1x128xf32> to vector<128x128xf32>
    %16 = arith.addf %13, %15 : vector<128x128xf32>
    %cst_16 = arith.constant 0.000000e+00 : f32
    %17 = vector.broadcast %cst_16 : f32 to vector<128x128xf32>
    %18 = arith.maximumf %16, %17 : vector<128x128xf32>
    %c0_17 = arith.constant 0 : index
    %c0_18 = arith.constant 0 : index
    %19 = vector.load %arg8[%c0_17, %c0_18] : memref<1x128xf32, #tpu.memory_space<vmem>>, vector<1x128xf32>
    %20 = vector.broadcast %19 : vector<1x128xf32> to vector<128x128xf32>
    %21 = arith.mulf %18, %20 : vector<128x128xf32>
    %cst_19 = arith.constant dense<0.000000e+00> : vector<128xf32>
    %22 = vector.multi_reduction <add>, %21, %cst_19 [1] : vector<128x128xf32> to vector<128xf32>
    %23 = vector.shape_cast %22 : vector<128xf32> to vector<1x128xf32>
    %c0_20 = arith.constant 0 : index
    %c0_21 = arith.constant 0 : index
    %24 = vector.load %arg9[%c0_20, %c0_21] : memref<1x128xf32, #tpu.memory_space<vmem>>, vector<1x128xf32>
    tpu.vector_store %arg9[%c0_20, %c0_21], %23 {strides = array<i32>} : memref<1x128xf32, #tpu.memory_space<vmem>>, vector<1x128xf32>,
    return
  }
  func.func @transform_0(%arg0: i32) -> (i32, i32) {
    %c0_i32 = arith.constant 0 : i32
    %c0_i32_0 = arith.constant 0 : i32
    return %arg0, %c0_i32 : i32, i32
  }
  func.func @transform_1(%arg0: i32) -> (i32, i32) {
    %c0_i32 = arith.constant 0 : i32
    %c0_i32_0 = arith.constant 0 : i32
    return %arg0, %c0_i32 : i32, i32
  }
  func.func @transform_2(%arg0: i32) -> (i32, i32) {
    %c0_i32 = arith.constant 0 : i32
    %c0_i32_0 = arith.constant 0 : i32
    %c0_i32_1 = arith.constant 0 : i32
    return %c0_i32, %c0_i32_0 : i32, i32
  }
  func.func @transform_3(%arg0: i32) -> (i32, i32) {
    %c0_i32 = arith.constant 0 : i32
    %c0_i32_0 = arith.constant 0 : i32
    %c0_i32_1 = arith.constant 0 : i32
    return %c0_i32, %c0_i32_0 : i32, i32
  }
  func.func @transform_4(%arg0: i32) -> (i32, i32) {
    %c0_i32 = arith.constant 0 : i32
    %c0_i32_0 = arith.constant 0 : i32
    %c0_i32_1 = arith.constant 0 : i32
    return %c0_i32, %c0_i32_0 : i32, i32
  }
  func.func @transform_5(%arg0: i32) -> (i32, i32) {
    %c0_i32 = arith.constant 0 : i32
    %c0_i32_0 = arith.constant 0 : i32
    %c0_i32_1 = arith.constant 0 : i32
    return %c0_i32, %c0_i32_0 : i32, i32
  }
  func.func @transform_6(%arg0: i32) -> (i32, i32) {
    %c0_i32 = arith.constant 0 : i32
    %c0_i32_0 = arith.constant 0 : i32
    %c0_i32_1 = arith.constant 0 : i32
    return %c0_i32, %c0_i32_0 : i32, i32
  }
  func.func @transform_7(%arg0: i32) -> (i32, i32) {
    %c0_i32 = arith.constant 0 : i32
    %c0_i32_0 = arith.constant 0 : i32
    %c0_i32_1 = arith.constant 0 : i32
    return %c0_i32, %c0_i32_0 : i32, i32
  }
  func.func @transform_8(%arg0: i32) -> (i32, i32) {
    %c0_i32 = arith.constant 0 : i32
    %c0_i32_0 = arith.constant 0 : i32
    return %c0_i32, %arg0 : i32, i32
  }
}

</mosaic_0001>

<llo_original>
// kernel: critic_forward.1
$region0: #{critic_forward.1}
  #allocation0 [shape = 'u32[]', space=smem, size = 0x4, offset = 0x4, fixed_abs, tag = 'smem constant byte address 0x4 - core index']
  #allocation1 [shape = 'u32[144,128]{1,0:T(1,128)}', space=vmem, size = 0x12000, scoped, tag = 'internal scratch']
  %s0 = inlined_call_operand.vmem [shape: f32[128,24], index: 0, kind: input, shape index: {}]
  %s1 = inlined_call_operand.vmem [shape: f32[128,8], index: 1, kind: input, shape index: {}]
  %s2 = inlined_call_operand.vmem [shape: f32[24,128], index: 2, kind: input, shape index: {}]
  %s3 = inlined_call_operand.vmem [shape: f32[8,128], index: 3, kind: input, shape index: {}]
  %s4 = inlined_call_operand.vmem [shape: f32[1,128], index: 4, kind: input, shape index: {}]
  %s5 = inlined_call_operand.vmem [shape: f32[128,128], index: 5, kind: input, shape index: {}]
  %s6 = inlined_call_operand.vmem [shape: f32[1,128], index: 6, kind: input, shape index: {}]
  %s7 = inlined_call_operand.vmem [shape: f32[1,128], index: 7, kind: input, shape index: {}]
  %s8 = inlined_call_operand.vmem [shape: f32[1,128], index: 8, kind: output, shape index: {}]
  %s9 = sld [smem:[#allocation0]]
  $region42: #{critic_forward.1} parent=0
    _
  %s11 = ssub.s32 1, %s9
  %s12 = scalar_select 0, %s11, %s9
  // Predicated region
  $region2: #{critic_forward.1} parent=0 // pred_check
    _
  $region3: #{critic_forward.1} parent=0 // pred_check_branch
    %14 = sbr.rel (0) target = $region5
  $region4: #{critic_forward.1} parent=0 // pred_region
    _
  $region5: #{critic_forward.1} parent=0 // pred_fallthru
    _
  // Predicated region
  $region6: #{critic_forward.1} parent=0 // pred_check
    _
  $region7: #{critic_forward.1} parent=0 // pred_check_branch
    %16 = sbr.rel (0) target = $region9
  $region8: #{critic_forward.1} parent=0 // pred_region
    _
  $region9: #{critic_forward.1} parent=0 // pred_fallthru
    _
  // Predicated region
  $region10: #{critic_forward.1} parent=0 // pred_check
    _
  $region11: #{critic_forward.1} parent=0 // pred_check_branch
    %18 = sbr.rel (0) target = $region13
  $region12: #{critic_forward.1} parent=0 // pred_region
    _
  $region13: #{critic_forward.1} parent=0 // pred_fallthru
    _
  // Predicated region
  $region14: #{critic_forward.1} parent=0 // pred_check
    _
  $region15: #{critic_forward.1} parent=0 // pred_check_branch
    %20 = sbr.rel (0) target = $region17
  $region16: #{critic_forward.1} parent=0 // pred_region
    _
  $region17: #{critic_forward.1} parent=0 // pred_fallthru
    _
  // Predicated region
  $region18: #{critic_forward.1} parent=0 // pred_check
    _
  $region19: #{critic_forward.1} parent=0 // pred_check_branch
    %22 = sbr.rel (0) target = $region21
  $region20: #{critic_forward.1} parent=0 // pred_region
    _
  $region21: #{critic_forward.1} parent=0 // pred_fallthru
    _
  // Predicated region
  $region22: #{critic_forward.1} parent=0 // pred_check
    _
  $region23: #{critic_forward.1} parent=0 // pred_check_branch
    %24 = sbr.rel (0) target = $region25
  $region24: #{critic_forward.1} parent=0 // pred_region
    _
  $region25: #{critic_forward.1} parent=0 // pred_fallthru
    _
  // Predicated region
  $region26: #{critic_forward.1} parent=0 // pred_check
    _
  $region27: #{critic_forward.1} parent=0 // pred_check_branch
    %26 = sbr.rel (0) target = $region29
  $region28: #{critic_forward.1} parent=0 // pred_region
    _
  $region29: #{critic_forward.1} parent=0 // pred_fallthru
    _
  // Predicated region
  $region30: #{critic_forward.1} parent=0 // pred_check
    _
  $region31: #{critic_forward.1} parent=0 // pred_check_branch
    %28 = sbr.rel (0) target = $region33
  $region32: #{critic_forward.1} parent=0 // pred_region
    _
  $region33: #{critic_forward.1} parent=0 // pred_fallthru
    _
  %v29 = vld [vmem:[%s0] sm:$0xff]
  %v30 = vld [vmem:[%s0 + $0x8] sm:$0xff]
  %v31 = vld [vmem:[%s0 + $0x10] sm:$0xff]
  %v32 = vld [vmem:[%s0 + $0x18] sm:$0xff]
  %v33 = vld [vmem:[%s0 + $0x20] sm:$0xff]
  %v34 = vld [vmem:[%s0 + $0x28] sm:$0xff]
  %v35 = vld [vmem:[%s0 + $0x30] sm:$0xff]
  %v36 = vld [vmem:[%s0 + $0x38] sm:$0xff]
  %v37 = vld [vmem:[%s0 + $0x40] sm:$0xff]
  %v38 = vld [vmem:[%s0 + $0x48] sm:$0xff]
  %v39 = vld [vmem:[%s0 + $0x50] sm:$0xff]
  %v40 = vld [vmem:[%s0 + $0x58] sm:$0xff]
  %v41 = vld [vmem:[%s0 + $0x60] sm:$0xff]
  %v42 = vld [vmem:[%s0 + $0x68] sm:$0xff]
  %v43 = vld [vmem:[%s0 + $0x70] sm:$0xff]
  %v44 = vld [vmem:[%s0 + $0x78] sm:$0xff]
  %v45 = vld [vmem:[%s2] sm:$0xff]
  %v46 = vld [vmem:[%s2 + $0x8] sm:$0xff]
  %v47 = vld [vmem:[%s2 + $0x10] sm:$0xff]
  %v48 = vld [vmem:[%s1] sm:$0xff]
  %v49 = vld [vmem:[%s1 + $0x8] sm:$0xff]
  %v50 = vld [vmem:[%s1 + $0x10] sm:$0xff]
  %v51 = vld [vmem:[%s1 + $0x18] sm:$0xff]
  %v52 = vld [vmem:[%s1 + $0x20] sm:$0xff]
  %v53 = vld [vmem:[%s1 + $0x28] sm:$0xff]
  %v54 = vld [vmem:[%s1 + $0x30] sm:$0xff]
  %v55 = vld [vmem:[%s1 + $0x38] sm:$0xff]
  %v56 = vld [vmem:[%s1 + $0x40] sm:$0xff]
  %v57 = vld [vmem:[%s1 + $0x48] sm:$0xff]
  %v58 = vld [vmem:[%s1 + $0x50] sm:$0xff]
  %v59 = vld [vmem:[%s1 + $0x58] sm:$0xff]
  %v60 = vld [vmem:[%s1 + $0x60] sm:$0xff]
  %v61 = vld [vmem:[%s1 + $0x68] sm:$0xff]
  %v62 = vld [vmem:[%s1 + $0x70] sm:$0xff]
  %v63 = vld [vmem:[%s1 + $0x78] sm:$0xff]
  %v64 = vld [vmem:[%s3] sm:$0xff]
  %vm65 = vcmask 64512
  %v67 = vsel %vm65, %v48, 0
  %v70 = vsel %vm65, %v49, 0
  %v73 = vsel %vm65, %v50, 0
  %v76 = vsel %vm65, %v51, 0
  %v79 = vsel %vm65, %v52, 0
  %v82 = vsel %vm65, %v53, 0
  %v85 = vsel %vm65, %v54, 0
  %v88 = vsel %vm65, %v55, 0
  %v91 = vsel %vm65, %v56, 0
  %v94 = vsel %vm65, %v57, 0
  %v97 = vsel %vm65, %v58, 0
  %v100 = vsel %vm65, %v59, 0
  %v103 = vsel %vm65, %v60, 0
  %v106 = vsel %vm65, %v61, 0
  %v109 = vsel %vm65, %v62, 0
  %v112 = vsel %vm65, %v63, 0
  %114 = vmatprep.subr.mxu0 0.0
  %115 = vmatpush1.msra.mxu0 %v64
  %116 = vmatprep.subr.mxu0 0.0
  %117 = vmatpush1.msra.mxu0 0.0
  %118 = vmatprep.subr.mxu0 0.0
  %119 = vmatpush1.msra.mxu0 0.0
  %120 = vmatprep.subr.mxu0 0.0
  %121 = vmatpush1.msra.mxu0 0.0
  %122 = vmatprep.subr.mxu0 0.0
  %123 = vmatpush1.msra.mxu0 0.0
  %124 = vmatprep.subr.mxu0 0.0
  %125 = vmatpush1.msra.mxu0 0.0
  %126 = vmatprep.subr.mxu0 0.0
  %127 = vmatpush1.msra.mxu0 0.0
  %128 = vmatprep.subr.mxu0 0.0
  %129 = vmatpush1.msra.mxu0 0.0
  %130 = vmatprep.subr.mxu0 0.0
  %131 = vmatpush1.msra.mxu0 0.0
  %132 = vmatprep.subr.mxu0 0.0
  %133 = vmatpush1.msra.mxu0 0.0
  %134 = vmatprep.subr.mxu0 0.0
  %135 = vmatpush1.msra.mxu0 0.0
  %136 = vmatprep.subr.mxu0 0.0
  %137 = vmatpush1.msra.mxu0 0.0
  %138 = vmatprep.subr.mxu0 0.0
  %139 = vmatpush1.msra.mxu0 0.0
  %140 = vmatprep.subr.mxu0 0.0
  %141 = vmatpush1.msra.mxu0 0.0
  %142 = vmatprep.subr.mxu0 0.0
  %143 = vmatpush1.msra.mxu0 0.0
  %144 = vmatprep.subr.mxu0 0.0
  %145 = vmatpush1.msra.mxu0 0.0
  %146 = vmatprep.subr.mxu0 0.0
  %147 = vmatpush1.msra.mxu0 0.0
  %148 = vmatprep.subr.mxu0 0.0
  %149 = vmatpush1.msra.mxu0 0.0
  %150 = vmatprep.subr.mxu0 0.0
  %151 = vmatpush1.msra.mxu0 0.0
  %152 = vmatprep.subr.mxu0 0.0
  %153 = vmatpush1.msra.mxu0 0.0
  %154 = vmatprep.subr.mxu0 0.0
  %155 = vmatpush1.msra.mxu0 0.0
  %156 = vmatprep.subr.mxu0 0.0
  %157 = vmatpush1.msra.mxu0 0.0
  %158 = vmatprep.subr.mxu0 0.0
  %159 = vmatpush1.msra.mxu0 0.0
  %160 = vmatprep.subr.mxu0 0.0
  %161 = vmatpush1.msra.mxu0 0.0
  %162 = vmatprep.subr.mxu0 0.0
  %163 = vmatpush1.msra.mxu0 0.0
  %164 = vmatprep.subr.mxu0 0.0
  %165 = vmatpush1.msra.mxu0 0.0
  %166 = vmatprep.subr.mxu0 0.0
  %167 = vmatpush1.msra.mxu0 0.0
  %168 = vmatprep.subr.mxu0 0.0
  %169 = vmatpush1.msra.mxu0 0.0
  %170 = vmatprep.subr.mxu0 0.0
  %171 = vmatpush1.msra.mxu0 0.0
  %172 = vmatprep.subr.mxu0 0.0
  %173 = vmatpush1.msra.mxu0 0.0
  %174 = vmatprep.subr.mxu0 0.0
  %175 = vmatpush1.msra.mxu0 0.0
  %176 = vmatprep.subr.mxu0 0.0
  %177 = vmatpush1.msra.mxu0 0.0
  %178 = vmatprep.mubr.f32.mxu0 0.0
  %179 = vmatmul.mubr.f32.gmra.mrb[0].mxu0 %v67
  %v180 = vpop.f32.mrb[0].mxu0
  %v181 = vadd.f32 0.0, %v180
  %v182 = vpop.f32.mrb[0].mxu0
  %183 = vmatprep.mubr.f32.mxu0 0.0
  %184 = vmatmul.mubr.f32.gmra.mrb[0].mxu0 %v70
  %v185 = vpop.f32.mrb[0].mxu0
  %v186 = vadd.f32 0.0, %v185
  %v187 = vpop.f32.mrb[0].mxu0
  %188 = vmatprep.mubr.f32.mxu0 0.0
  %189 = vmatmul.mubr.f32.gmra.mrb[0].mxu0 %v73
  %v190 = vpop.f32.mrb[0].mxu0
  %v191 = vadd.f32 0.0, %v190
  %v192 = vpop.f32.mrb[0].mxu0
  %193 = vmatprep.mubr.f32.mxu0 0.0
  %194 = vmatmul.mubr.f32.gmra.mrb[0].mxu0 %v76
  %v195 = vpop.f32.mrb[0].mxu0
  %v196 = vadd.f32 0.0, %v195
  %v197 = vpop.f32.mrb[0].mxu0
  %198 = vmatprep.mubr.f32.mxu0 0.0
  %199 = vmatmul.mubr.f32.gmra.mrb[0].mxu0 %v79
  %v200 = vpop.f32.mrb[0].mxu0
  %v201 = vadd.f32 0.0, %v200
  %v202 = vpop.f32.mrb[0].mxu0
  %203 = vmatprep.mubr.f32.mxu0 0.0
  %204 = vmatmul.mubr.f32.gmra.mrb[0].mxu0 %v82
  %v205 = vpop.f32.mrb[0].mxu0
  %v206 = vadd.f32 0.0, %v205
  %v207 = vpop.f32.mrb[0].mxu0
  %208 = vmatprep.mubr.f32.mxu0 0.0
  %209 = vmatmul.mubr.f32.gmra.mrb[0].mxu0 %v85
  %v210 = vpop.f32.mrb[0].mxu0
  %v211 = vadd.f32 0.0, %v210
  %v212 = vpop.f32.mrb[0].mxu0
  %213 = vmatprep.mubr.f32.mxu0 0.0
  %214 = vmatmul.mubr.f32.gmra.mrb[0].mxu0 %v88
  %v215 = vpop.f32.mrb[0].mxu0
  %v216 = vadd.f32 0.0, %v215
  %v217 = vpop.f32.mrb[0].mxu0
  %218 = vmatprep.mubr.f32.mxu0 0.0
  %219 = vmatmul.mubr.f32.gmra.mrb[0].mxu0 %v91
  %v220 = vpop.f32.mrb[0].mxu0
  %v221 = vadd.f32 0.0, %v220
  %v222 = vpop.f32.mrb[0].mxu0
  %223 = vmatprep.mubr.f32.mxu0 0.0
  %224 = vmatmul.mubr.f32.gmra.mrb[0].mxu0 %v94
  %v225 = vpop.f32.mrb[0].mxu0
  %v226 = vadd.f32 0.0, %v225
  %v227 = vpop.f32.mrb[0].mxu0
  %228 = vmatprep.mubr.f32.mxu0 0.0
  %229 = vmatmul.mubr.f32.gmra.mrb[0].mxu0 %v97
  %v230 = vpop.f32.mrb[0].mxu0
  %v231 = vadd.f32 0.0, %v230
  %v232 = vpop.f32.mrb[0].mxu0
  %233 = vmatprep.mubr.f32.mxu0 0.0
  %234 = vmatmul.mubr.f32.gmra.mrb[0].mxu0 %v100
  %v235 = vpop.f32.mrb[0].mxu0
  %v236 = vadd.f32 0.0, %v235
  %v237 = vpop.f32.mrb[0].mxu0
  %238 = vmatprep.mubr.f32.mxu0 0.0
  %239 = vmatmul.mubr.f32.gmra.mrb[0].mxu0 %v103
  %v240 = vpop.f32.mrb[0].mxu0
  %v241 = vadd.f32 0.0, %v240
  %v242 = vpop.f32.mrb[0].mxu0
  %243 = vmatprep.mubr.f32.mxu0 0.0
  %244 = vmatmul.mubr.f32.gmra.mrb[0].mxu0 %v106
  %v245 = vpop.f32.mrb[0].mxu0
  %v246 = vadd.f32 0.0, %v245
  %v247 = vpop.f32.mrb[0].mxu0
  %248 = vmatprep.mubr.f32.mxu0 0.0
  %249 = vmatmul.mubr.f32.gmra.mrb[0].mxu0 %v109
  %v250 = vpop.f32.mrb[0].mxu0
  %v251 = vadd.f32 0.0, %v250
  %v252 = vpop.f32.mrb[0].mxu0
  %253 = vmatprep.mubr.f32.mxu0 0.0
  %254 = vmatmul.mubr.f32.gmra.mrb[0].mxu0 %v112
  %v255 = vpop.f32.mrb[0].mxu0
  %v256 = vadd.f32 0.0, %v255
  %v257 = vpop.f32.mrb[0].mxu0
  %258 = vdwg.mxu0
  %vm259 = vcmask 195584
  %v261 = vsel %vm259, %v29, 0
  %v264 = vsel %vm259, %v30, 0
  %v267 = vsel %vm259, %v31, 0
  %v270 = vsel %vm259, %v32, 0
  %v273 = vsel %vm259, %v33, 0
  %v276 = vsel %vm259, %v34, 0
  %v279 = vsel %vm259, %v35, 0
  %v282 = vsel %vm259, %v36, 0
  %v285 = vsel %vm259, %v37, 0
  %v288 = vsel %vm259, %v38, 0
  %v291 = vsel %vm259, %v39, 0
  %v294 = vsel %vm259, %v40, 0
  %v297 = vsel %vm259, %v41, 0
  %v300 = vsel %vm259, %v42, 0
  %v303 = vsel %vm259, %v43, 0
  %v306 = vsel %vm259, %v44, 0
  %308 = vmatprep.subr.mxu0 0.0
  %309 = vmatpush1.msra.mxu0 %v45
  %310 = vmatprep.subr.mxu0 0.0
  %311 = vmatpush1.msra.mxu0 %v46
  %312 = vmatprep.subr.mxu0 0.0
  %313 = vmatpush1.msra.mxu0 %v47
  %314 = vmatprep.subr.mxu0 0.0
  %315 = vmatpush1.msra.mxu0 0.0
  %316 = vmatprep.subr.mxu0 0.0
  %317 = vmatpush1.msra.mxu0 0.0
  %318 = vmatprep.subr.mxu0 0.0
  %319 = vmatpush1.msra.mxu0 0.0
  %320 = vmatprep.subr.mxu0 0.0
  %321 = vmatpush1.msra.mxu0 0.0
  %322 = vmatprep.subr.mxu0 0.0
  %323 = vmatpush1.msra.mxu0 0.0
  %324 = vmatprep.subr.mxu0 0.0
  %325 = vmatpush1.msra.mxu0 0.0
  %326 = vmatprep.subr.mxu0 0.0
  %327 = vmatpush1.msra.mxu0 0.0
  %328 = vmatprep.subr.mxu0 0.0
  %329 = vmatpush1.msra.mxu0 0.0
  %330 = vmatprep.subr.mxu0 0.0
  %331 = vmatpush1.msra.mxu0 0.0
  %332 = vmatprep.subr.mxu0 0.0
  %333 = vmatpush1.msra.mxu0 0.0
  %334 = vmatprep.subr.mxu0 0.0
  %335 = vmatpush1.msra.mxu0 0.0
  %336 = vmatprep.subr.mxu0 0.0
  %337 = vmatpush1.msra.mxu0 0.0
  %338 = vmatprep.subr.mxu0 0.0
  %339 = vmatpush1.msra.mxu0 0.0
  %340 = vmatprep.subr.mxu0 0.0
  %341 = vmatpush1.msra.mxu0 0.0
  %342 = vmatprep.subr.mxu0 0.0
  %343 = vmatpush1.msra.mxu0 0.0
  %344 = vmatprep.subr.mxu0 0.0
  %345 = vmatpush1.msra.mxu0 0.0
  %346 = vmatprep.subr.mxu0 0.0
  %347 = vmatpush1.msra.mxu0 0.0
  %348 = vmatprep.subr.mxu0 0.0
  %349 = vmatpush1.msra.mxu0 0.0
  %350 = vmatprep.subr.mxu0 0.0
  %351 = vmatpush1.msra.mxu0 0.0
  %352 = vmatprep.subr.mxu0 0.0
  %353 = vmatpush1.msra.mxu0 0.0
  %354 = vmatprep.subr.mxu0 0.0
  %355 = vmatpush1.msra.mxu0 0.0
  %356 = vmatprep.subr.mxu0 0.0
  %357 = vmatpush1.msra.mxu0 0.0
  %358 = vmatprep.subr.mxu0 0.0
  %359 = vmatpush1.msra.mxu0 0.0
  %360 = vmatprep.subr.mxu0 0.0
  %361 = vmatpush1.msra.mxu0 0.0
  %362 = vmatprep.subr.mxu0 0.0
  %363 = vmatpush1.msra.mxu0 0.0
  %364 = vmatprep.subr.mxu0 0.0
  %365 = vmatpush1.msra.mxu0 0.0
  %366 = vmatprep.subr.mxu0 0.0
  %367 = vmatpush1.msra.mxu0 0.0
  %368 = vmatprep.subr.mxu0 0.0
  %369 = vmatpush1.msra.mxu0 0.0
  %370 = vmatprep.subr.mxu0 0.0
  %371 = vmatpush1.msra.mxu0 0.0
  %372 = vmatprep.mubr.f32.mxu0 0.0
  %373 = vmatmul.mubr.f32.gmra.mrb[0].mxu0 %v261
  %v374 = vpop.f32.mrb[0].mxu0
  %v375 = vadd.f32 %v181, %v374
  %v376 = vpop.f32.mrb[0].mxu0
  %377 = vmatprep.mubr.f32.mxu0 0.0
  %378 = vmatmul.mubr.f32.gmra.mrb[0].mxu0 %v264
  %v379 = vpop.f32.mrb[0].mxu0
  %v380 = vadd.f32 %v186, %v379
  %v381 = vpop.f32.mrb[0].mxu0
  %382 = vmatprep.mubr.f32.mxu0 0.0
  %383 = vmatmul.mubr.f32.gmra.mrb[0].mxu0 %v267
  %v384 = vpop.f32.mrb[0].mxu0
  %v385 = vadd.f32 %v191, %v384
  %v386 = vpop.f32.mrb[0].mxu0
  %387 = vmatprep.mubr.f32.mxu0 0.0
  %388 = vmatmul.mubr.f32.gmra.mrb[0].mxu0 %v270
  %v389 = vpop.f32.mrb[0].mxu0
  %v390 = vadd.f32 %v196, %v389
  %v391 = vpop.f32.mrb[0].mxu0
  %392 = vmatprep.mubr.f32.mxu0 0.0
  %393 = vmatmul.mubr.f32.gmra.mrb[0].mxu0 %v273
  %v394 = vpop.f32.mrb[0].mxu0
  %v395 = vadd.f32 %v201, %v394
  %v396 = vpop.f32.mrb[0].mxu0
  %397 = vmatprep.mubr.f32.mxu0 0.0
  %398 = vmatmul.mubr.f32.gmra.mrb[0].mxu0 %v276
  %v399 = vpop.f32.mrb[0].mxu0
  %v400 = vadd.f32 %v206, %v399
  %v401 = vpop.f32.mrb[0].mxu0
  %402 = vmatprep.mubr.f32.mxu0 0.0
  %403 = vmatmul.mubr.f32.gmra.mrb[0].mxu0 %v279
  %v404 = vpop.f32.mrb[0].mxu0
  %v405 = vadd.f32 %v211, %v404
  %v406 = vpop.f32.mrb[0].mxu0
  %407 = vmatprep.mubr.f32.mxu0 0.0
  %408 = vmatmul.mubr.f32.gmra.mrb[0].mxu0 %v282
  %v409 = vpop.f32.mrb[0].mxu0
  %v410 = vadd.f32 %v216, %v409
  %v411 = vpop.f32.mrb[0].mxu0
  %412 = vmatprep.mubr.f32.mxu0 0.0
  %413 = vmatmul.mubr.f32.gmra.mrb[0].mxu0 %v285
  %v414 = vpop.f32.mrb[0].mxu0
  %v415 = vadd.f32 %v221, %v414
  %v416 = vpop.f32.mrb[0].mxu0
  %417 = vmatprep.mubr.f32.mxu0 0.0
  %418 = vmatmul.mubr.f32.gmra.mrb[0].mxu0 %v288
  %v419 = vpop.f32.mrb[0].mxu0
  %v420 = vadd.f32 %v226, %v419
  %v421 = vpop.f32.mrb[0].mxu0
  %422 = vmatprep.mubr.f32.mxu0 0.0
  %423 = vmatmul.mubr.f32.gmra.mrb[0].mxu0 %v291
  %v424 = vpop.f32.mrb[0].mxu0
  %v425 = vadd.f32 %v231, %v424
  %v426 = vpop.f32.mrb[0].mxu0
  %427 = vmatprep.mubr.f32.mxu0 0.0
  %428 = vmatmul.mubr.f32.gmra.mrb[0].mxu0 %v294
  %v429 = vpop.f32.mrb[0].mxu0
  %v430 = vadd.f32 %v236, %v429
  %v431 = vpop.f32.mrb[0].mxu0
  %432 = vmatprep.mubr.f32.mxu0 0.0
  %433 = vmatmul.mubr.f32.gmra.mrb[0].mxu0 %v297
  %v434 = vpop.f32.mrb[0].mxu0
  %v435 = vadd.f32 %v241, %v434
  %v436 = vpop.f32.mrb[0].mxu0
  %437 = vmatprep.mubr.f32.mxu0 0.0
  %438 = vmatmul.mubr.f32.gmra.mrb[0].mxu0 %v300
  %v439 = vpop.f32.mrb[0].mxu0
  %v440 = vadd.f32 %v246, %v439
  %v441 = vpop.f32.mrb[0].mxu0
  %442 = vmatprep.mubr.f32.mxu0 0.0
  %443 = vmatmul.mubr.f32.gmra.mrb[0].mxu0 %v303
  %v444 = vpop.f32.mrb[0].mxu0
  %v445 = vadd.f32 %v251, %v444
  %v446 = vpop.f32.mrb[0].mxu0
  %447 = vmatprep.mubr.f32.mxu0 0.0
  %448 = vmatmul.mubr.f32.gmra.mrb[0].mxu0 %v306
  %v449 = vpop.f32.mrb[0].mxu0
  %v450 = vadd.f32 %v256, %v449
  %v451 = vpop.f32.mrb[0].mxu0
  %452 = vdwg.mxu0
  %v453 = vld [vmem:[%s4] sm:$0x1]
  %v455 = vlaneseq
  %v456 = vshrl.u32 %v455, 7
  %v457 = vsub.s32 0, %v456
  %v458 = vrot.slane %v453, %v457
  %v460 = vadd.f32 %v375, %v458
  %v461 = vadd.f32 %v380, %v458
  %v462 = vadd.f32 %v385, %v458
  %v463 = vadd.f32 %v390, %v458
  %v464 = vadd.f32 %v395, %v458
  %v465 = vadd.f32 %v400, %v458
  %v466 = vadd.f32 %v405, %v458
  %v467 = vadd.f32 %v410, %v458
  %v468 = vadd.f32 %v415, %v458
  %v469 = vadd.f32 %v420, %v458
  %v470 = vadd.f32 %v425, %v458
  %v471 = vadd.f32 %v430, %v458
  %v472 = vadd.f32 %v435, %v458
  %v473 = vadd.f32 %v440, %v458
  %v474 = vadd.f32 %v445, %v458
  %v475 = vadd.f32 %v450, %v458
  %v476 = vmax.f32 %v460, 0.0
  %v477 = vmax.f32 %v461, 0.0
  %v478 = vmax.f32 %v462, 0.0
  %v479 = vmax.f32 %v463, 0.0
  %v480 = vmax.f32 %v464, 0.0
  %v481 = vmax.f32 %v465, 0.0
  %v482 = vmax.f32 %v466, 0.0
  %v483 = vmax.f32 %v467, 0.0
  %v484 = vmax.f32 %v468, 0.0
  %v485 = vmax.f32 %v469, 0.0
  %v486 = vmax.f32 %v470, 0.0
  %v487 = vmax.f32 %v471, 0.0
  %v488 = vmax.f32 %v472, 0.0
  %v489 = vmax.f32 %v473, 0.0
  %v490 = vmax.f32 %v474, 0.0
  %v491 = vmax.f32 %v475, 0.0
  %v492 = vld [vmem:[%s5] sm:$0xff]
  %v493 = vld [vmem:[%s5 + $0x8] sm:$0xff]
  %v494 = vld [vmem:[%s5 + $0x10] sm:$0xff]
  %v495 = vld [vmem:[%s5 + $0x18] sm:$0xff]
  %v496 = vld [vmem:[%s5 + $0x20] sm:$0xff]
  %v497 = vld [vmem:[%s5 + $0x28] sm:$0xff]
  %v498 = vld [vmem:[%s5 + $0x30] sm:$0xff]
  %v499 = vld [vmem:[%s5 + $0x38] sm:$0xff]
  %v500 = vld [vmem:[%s5 + $0x40] sm:$0xff]
  %v501 = vld [vmem:[%s5 + $0x48] sm:$0xff]
  %v502 = vld [vmem:[%s5 + $0x50] sm:$0xff]
  %v503 = vld [vmem:[%s5 + $0x58] sm:$0xff]
  %v504 = vld [vmem:[%s5 + $0x60] sm:$0xff]
  %v505 = vld [vmem:[%s5 + $0x68] sm:$0xff]
  %v506 = vld [vmem:[%s5 + $0x70] sm:$0xff]
  %v507 = vld [vmem:[%s5 + $0x78] sm:$0xff]
  %v508 = vld [vmem:[%s6] sm:$0x1]
  %v510 = vlaneseq
  %v511 = vshrl.u32 %v510, 7
  %v512 = vsub.s32 0, %v511
  %v513 = vrot.slane %v508, %v512
  %515 = vmatprep.subr.mxu0 0.0
  %516 = vmatpush1.msra.mxu0 %v492
  %517 = vmatprep.subr.mxu0 0.0
  %518 = vmatpush1.msra.mxu0 %v493
  %519 = vmatprep.subr.mxu0 0.0
  %520 = vmatpush1.msra.mxu0 %v494
  %521 = vmatprep.subr.mxu0 0.0
  %522 = vmatpush1.msra.mxu0 %v495
  %523 = vmatprep.subr.mxu0 0.0
  %524 = vmatpush1.msra.mxu0 %v496
  %525 = vmatprep.subr.mxu0 0.0
  %526 = vmatpush1.msra.mxu0 %v497
  %527 = vmatprep.subr.mxu0 0.0
  %528 = vmatpush1.msra.mxu0 %v498
  %529 = vmatprep.subr.mxu0 0.0
  %530 = vmatpush1.msra.mxu0 %v499
  %531 = vmatprep.subr.mxu0 0.0
  %532 = vmatpush1.msra.mxu0 %v500
  %533 = vmatprep.subr.mxu0 0.0
  %534 = vmatpush1.msra.mxu0 %v501
  %535 = vmatprep.subr.mxu0 0.0
  %536 = vmatpush1.msra.mxu0 %v502
  %537 = vmatprep.subr.mxu0 0.0
  %538 = vmatpush1.msra.mxu0 %v503
  %539 = vmatprep.subr.mxu0 0.0
  %540 = vmatpush1.msra.mxu0 %v504
  %541 = vmatprep.subr.mxu0 0.0
  %542 = vmatpush1.msra.mxu0 %v505
  %543 = vmatprep.subr.mxu0 0.0
  %544 = vmatpush1.msra.mxu0 %v506
  %545 = vmatprep.subr.mxu0 0.0
  %546 = vmatpush1.msra.mxu0 %v507
  %547 = vmatprep.subr.mxu0 0.0
  %548 = vmatpush1.msra.mxu0 0.0
  %549 = vmatprep.subr.mxu0 0.0
  %550 = vmatpush1.msra.mxu0 0.0
  %551 = vmatprep.subr.mxu0 0.0
  %552 = vmatpush1.msra.mxu0 0.0
  %553 = vmatprep.subr.mxu0 0.0
  %554 = vmatpush1.msra.mxu0 0.0
  %555 = vmatprep.subr.mxu0 0.0
  %556 = vmatpush1.msra.mxu0 0.0
  %557 = vmatprep.subr.mxu0 0.0
  %558 = vmatpush1.msra.mxu0 0.0
  %559 = vmatprep.subr.mxu0 0.0
  %560 = vmatpush1.msra.mxu0 0.0
  %561 = vmatprep.subr.mxu0 0.0
  %562 = vmatpush1.msra.mxu0 0.0
  %563 = vmatprep.subr.mxu0 0.0
  %564 = vmatpush1.msra.mxu0 0.0
  %565 = vmatprep.subr.mxu0 0.0
  %566 = vmatpush1.msra.mxu0 0.0
  %567 = vmatprep.subr.mxu0 0.0
  %568 = vmatpush1.msra.mxu0 0.0
  %569 = vmatprep.subr.mxu0 0.0
  %570 = vmatpush1.msra.mxu0 0.0
  %571 = vmatprep.subr.mxu0 0.0
  %572 = vmatpush1.msra.mxu0 0.0
  %573 = vmatprep.subr.mxu0 0.0
  %574 = vmatpush1.msra.mxu0 0.0
  %575 = vmatprep.subr.mxu0 0.0
  %576 = vmatpush1.msra.mxu0 0.0
  %577 = vmatprep.subr.mxu0 0.0
  %578 = vmatpush1.msra.mxu0 0.0
  %579 = vmatprep.mubr.f32.mxu0 0.0
  %580 = vmatmul.mubr.f32.gmra.mrb[0].mxu0 %v476
  %v581 = vpop.f32.mrb[0].mxu0
  %v582 = vadd.f32 %v513, %v581
  %v583 = vpop.f32.mrb[0].mxu0
  %584 = vmatprep.mubr.f32.mxu0 0.0
  %585 = vmatmul.mubr.f32.gmra.mrb[0].mxu0 %v477
  %v586 = vpop.f32.mrb[0].mxu0
  %v587 = vadd.f32 %v513, %v586
  %v588 = vpop.f32.mrb[0].mxu0
  %589 = vmatprep.mubr.f32.mxu0 0.0
  %590 = vmatmul.mubr.f32.gmra.mrb[0].mxu0 %v478
  %v591 = vpop.f32.mrb[0].mxu0
  %v592 = vadd.f32 %v513, %v591
  %v593 = vpop.f32.mrb[0].mxu0
  %594 = vmatprep.mubr.f32.mxu0 0.0
  %595 = vmatmul.mubr.f32.gmra.mrb[0].mxu0 %v479
  %v596 = vpop.f32.mrb[0].mxu0
  %v597 = vadd.f32 %v513, %v596
  %v598 = vpop.f32.mrb[0].mxu0
  %599 = vmatprep.mubr.f32.mxu0 0.0
  %600 = vmatmul.mubr.f32.gmra.mrb[0].mxu0 %v480
  %v601 = vpop.f32.mrb[0].mxu0
  %v602 = vadd.f32 %v513, %v601
  %v603 = vpop.f32.mrb[0].mxu0
  %604 = vmatprep.mubr.f32.mxu0 0.0
  %605 = vmatmul.mubr.f32.gmra.mrb[0].mxu0 %v481
  %v606 = vpop.f32.mrb[0].mxu0
  %v607 = vadd.f32 %v513, %v606
  %v608 = vpop.f32.mrb[0].mxu0
  %609 = vmatprep.mubr.f32.mxu0 0.0
  %610 = vmatmul.mubr.f32.gmra.mrb[0].mxu0 %v482
  %v611 = vpop.f32.mrb[0].mxu0
  %v612 = vadd.f32 %v513, %v611
  %v613 = vpop.f32.mrb[0].mxu0
  %614 = vmatprep.mubr.f32.mxu0 0.0
  %615 = vmatmul.mubr.f32.gmra.mrb[0].mxu0 %v483
  %v616 = vpop.f32.mrb[0].mxu0
  %v617 = vadd.f32 %v513, %v616
  %v618 = vpop.f32.mrb[0].mxu0
  %619 = vmatprep.mubr.f32.mxu0 0.0
  %620 = vmatmul.mubr.f32.gmra.mrb[0].mxu0 %v484
  %v621 = vpop.f32.mrb[0].mxu0
  %v622 = vadd.f32 %v513, %v621
  %v623 = vpop.f32.mrb[0].mxu0
  %624 = vmatprep.mubr.f32.mxu0 0.0
  %625 = vmatmul.mubr.f32.gmra.mrb[0].mxu0 %v485
  %v626 = vpop.f32.mrb[0].mxu0
  %v627 = vadd.f32 %v513, %v626
  %v628 = vpop.f32.mrb[0].mxu0
  %629 = vmatprep.mubr.f32.mxu0 0.0
  %630 = vmatmul.mubr.f32.gmra.mrb[0].mxu0 %v486
  %v631 = vpop.f32.mrb[0].mxu0
  %v632 = vadd.f32 %v513, %v631
  %v633 = vpop.f32.mrb[0].mxu0
  %634 = vmatprep.mubr.f32.mxu0 0.0
  %635 = vmatmul.mubr.f32.gmra.mrb[0].mxu0 %v487
  %v636 = vpop.f32.mrb[0].mxu0
  %v637 = vadd.f32 %v513, %v636
  %v638 = vpop.f32.mrb[0].mxu0
  %639 = vmatprep.mubr.f32.mxu0 0.0
  %640 = vmatmul.mubr.f32.gmra.mrb[0].mxu0 %v488
  %v641 = vpop.f32.mrb[0].mxu0
  %v642 = vadd.f32 %v513, %v641
  %v643 = vpop.f32.mrb[0].mxu0
  %644 = vmatprep.mubr.f32.mxu0 0.0
  %645 = vmatmul.mubr.f32.gmra.mrb[0].mxu0 %v489
  %v646 = vpop.f32.mrb[0].mxu0
  %v647 = vadd.f32 %v513, %v646
  %v648 = vpop.f32.mrb[0].mxu0
  %649 = vmatprep.mubr.f32.mxu0 0.0
  %650 = vmatmul.mubr.f32.gmra.mrb[0].mxu0 %v490
  %v651 = vpop.f32.mrb[0].mxu0
  %v652 = vadd.f32 %v513, %v651
  %v653 = vpop.f32.mrb[0].mxu0
  %654 = vmatprep.mubr.f32.mxu0 0.0
  %655 = vmatmul.mubr.f32.gmra.mrb[0].mxu0 %v491
  %v656 = vpop.f32.mrb[0].mxu0
  %v657 = vadd.f32 %v513, %v656
  %v658 = vpop.f32.mrb[0].mxu0
  %659 = vdwg.mxu0
  %v660 = vmax.f32 %v582, 0.0
  %v661 = vmax.f32 %v587, 0.0
  %v662 = vmax.f32 %v592, 0.0
  %v663 = vmax.f32 %v597, 0.0
  %v664 = vmax.f32 %v602, 0.0
  %v665 = vmax.f32 %v607, 0.0
  %v666 = vmax.f32 %v612, 0.0
  %v667 = vmax.f32 %v617, 0.0
  %v668 = vmax.f32 %v622, 0.0
  %v669 = vmax.f32 %v627, 0.0
  %v670 = vmax.f32 %v632, 0.0
  %v671 = vmax.f32 %v637, 0.0
  %v672 = vmax.f32 %v642, 0.0
  %v673 = vmax.f32 %v647, 0.0
  %v674 = vmax.f32 %v652, 0.0
  %v675 = vmax.f32 %v657, 0.0
  %v676 = vld [vmem:[%s7] sm:$0x1]
  %v678 = vlaneseq
  %v679 = vshrl.u32 %v678, 7
  %v680 = vsub.s32 0, %v679
  %v681 = vrot.slane %v676, %v680
  %v683 = vmul.f32 %v660, %v681
  %v684 = vmul.f32 %v661, %v681
  %v685 = vmul.f32 %v662, %v681
  %v686 = vmul.f32 %v663, %v681
  %v687 = vmul.f32 %v664, %v681
  %v688 = vmul.f32 %v665, %v681
  %v689 = vmul.f32 %v666, %v681
  %v690 = vmul.f32 %v667, %v681
  %v691 = vmul.f32 %v668, %v681
  %v692 = vmul.f32 %v669, %v681
  %v693 = vmul.f32 %v670, %v681
  %v694 = vmul.f32 %v671, %v681
  %v695 = vmul.f32 %v672, %v681
  %v696 = vmul.f32 %v673, %v681
  %v697 = vmul.f32 %v674, %v681
  %v698 = vmul.f32 %v675, %v681
  %699 = vadd.xlane.f32.xlu0 %v683
  %v700 = vpop.xlane.xlu0 %699
  %701 = vadd.xlane.f32.xlu0 %v684
  %v702 = vpop.xlane.xlu0 %701
  %703 = vadd.xlane.f32.xlu0 %v685
  %v704 = vpop.xlane.xlu0 %703
  %705 = vadd.xlane.f32.xlu0 %v686
  %v706 = vpop.xlane.xlu0 %705
  %707 = vadd.xlane.f32.xlu0 %v687
  %v708 = vpop.xlane.xlu0 %707
  %709 = vadd.xlane.f32.xlu0 %v688
  %v710 = vpop.xlane.xlu0 %709
  %711 = vadd.xlane.f32.xlu0 %v689
  %v712 = vpop.xlane.xlu0 %711
  %713 = vadd.xlane.f32.xlu0 %v690
  %v714 = vpop.xlane.xlu0 %713
  %715 = vadd.xlane.f32.xlu0 %v691
  %v716 = vpop.xlane.xlu0 %715
  %717 = vadd.xlane.f32.xlu0 %v692
  %v718 = vpop.xlane.xlu0 %717
  %719 = vadd.xlane.f32.xlu0 %v693
  %v720 = vpop.xlane.xlu0 %719
  %721 = vadd.xlane.f32.xlu0 %v694
  %v722 = vpop.xlane.xlu0 %721
  %723 = vadd.xlane.f32.xlu0 %v695
  %v724 = vpop.xlane.xlu0 %723
  %725 = vadd.xlane.f32.xlu0 %v696
  %v726 = vpop.xlane.xlu0 %725
  %727 = vadd.xlane.f32.xlu0 %v697
  %v728 = vpop.xlane.xlu0 %727
  %729 = vadd.xlane.f32.xlu0 %v698
  %v730 = vpop.xlane.xlu0 %729
  %v747 = vlaneseq
  %v748 = vand.u32 %v747, 127
  %v749 = vlaneseq
  %v750 = vshrl.u32 %v749, 7
  %v751 = vsub.s32 %v748, %v750
  %v752 = vrot.slane %v700, %v751
  %v753 = vadd.s32 %v748, 4294967288
  %v754 = vlaneseq
  %v755 = vshrl.u32 %v754, 7
  %v756 = vsub.s32 %v753, %v755
  %v757 = vrot.slane %v702, %v756
  %vm758 = vcmask 130112
  %v759 = vsel %vm758, %v757, %v752
  %v760 = vadd.s32 %v748, 4294967280
  %v761 = vlaneseq
  %v762 = vshrl.u32 %v761, 7
  %v763 = vsub.s32 %v760, %v762
  %v764 = vrot.slane %v704, %v763
  %vm765 = vcmask 195712
  %v766 = vsel %vm765, %v764, %v759
  %v767 = vadd.s32 %v748, 4294967272
  %v768 = vlaneseq
  %v769 = vshrl.u32 %v768, 7
  %v770 = vsub.s32 %v767, %v769
  %v771 = vrot.slane %v706, %v770
  %vm772 = vcmask 261312
  %v773 = vsel %vm772, %v771, %v766
  %v774 = vadd.s32 %v748, 4294967264
  %v775 = vlaneseq
  %v776 = vshrl.u32 %v775, 7
  %v777 = vsub.s32 %v774, %v776
  %v778 = vrot.slane %v708, %v777
  %vm779 = vcmask 326912
  %v780 = vsel %vm779, %v778, %v773
  %v781 = vadd.s32 %v748, 4294967256
  %v782 = vlaneseq
  %v783 = vshrl.u32 %v782, 7
  %v784 = vsub.s32 %v781, %v783
  %v785 = vrot.slane %v710, %v784
  %vm786 = vcmask 392512
  %v787 = vsel %vm786, %v785, %v780
  %v788 = vadd.s32 %v748, 4294967248
  %v789 = vlaneseq
  %v790 = vshrl.u32 %v789, 7
  %v791 = vsub.s32 %v788, %v790
  %v792 = vrot.slane %v712, %v791
  %vm793 = vcmask 458112
  %v794 = vsel %vm793, %v792, %v787
  %v795 = vadd.s32 %v748, 4294967240
  %v796 = vlaneseq
  %v797 = vshrl.u32 %v796, 7
  %v798 = vsub.s32 %v795, %v797
  %v799 = vrot.slane %v714, %v798
  %vm800 = vcmask 523712
  %v801 = vsel %vm800, %v799, %v794
  %v802 = vadd.s32 %v748, 4294967232
  %v803 = vlaneseq
  %v804 = vshrl.u32 %v803, 7
  %v805 = vsub.s32 %v802, %v804
  %v806 = vrot.slane %v716, %v805
  %vm807 = vcmask 589312
  %v808 = vsel %vm807, %v806, %v801
  %v809 = vadd.s32 %v748, 4294967224
  %v810 = vlaneseq
  %v811 = vshrl.u32 %v810, 7
  %v812 = vsub.s32 %v809, %v811
  %v813 = vrot.slane %v718, %v812
  %vm814 = vcmask 654912
  %v815 = vsel %vm814, %v813, %v808
  %v816 = vadd.s32 %v748, 4294967216
  %v817 = vlaneseq
  %v818 = vshrl.u32 %v817, 7
  %v819 = vsub.s32 %v816, %v818
  %v820 = vrot.slane %v720, %v819
  %vm821 = vcmask 720512
  %v822 = vsel %vm821, %v820, %v815
  %v823 = vadd.s32 %v748, 4294967208
  %v824 = vlaneseq
  %v825 = vshrl.u32 %v824, 7
  %v826 = vsub.s32 %v823, %v825
  %v827 = vrot.slane %v722, %v826
  %vm828 = vcmask 786112
  %v829 = vsel %vm828, %v827, %v822
  %v830 = vadd.s32 %v748, 4294967200
  %v831 = vlaneseq
  %v832 = vshrl.u32 %v831, 7
  %v833 = vsub.s32 %v830, %v832
  %v834 = vrot.slane %v724, %v833
  %vm835 = vcmask 851712
  %v836 = vsel %vm835, %v834, %v829
  %v837 = vadd.s32 %v748, 4294967192
  %v838 = vlaneseq
  %v839 = vshrl.u32 %v838, 7
  %v840 = vsub.s32 %v837, %v839
  %v841 = vrot.slane %v726, %v840
  %vm842 = vcmask 917312
  %v843 = vsel %vm842, %v841, %v836
  %v844 = vadd.s32 %v748, 4294967184
  %v845 = vlaneseq
  %v846 = vshrl.u32 %v845, 7
  %v847 = vsub.s32 %v844, %v846
  %v848 = vrot.slane %v728, %v847
  %vm849 = vcmask 982912
  %v850 = vsel %vm849, %v848, %v843
  %v851 = vadd.s32 %v748, 4294967176
  %v852 = vlaneseq
  %v853 = vshrl.u32 %v852, 7
  %v854 = vsub.s32 %v851, %v853
  %v855 = vrot.slane %v730, %v854
  %vm856 = vcmask 1048512
  %v857 = vsel %vm856, %v855, %v850
  %859 = vst [vmem:[%s8] sm:$0x1] %v857
  // Predicated region
  $region34: #{critic_forward.1} parent=0 // pred_check
    _
  $region35: #{critic_forward.1} parent=0 // pred_check_branch
    %861 = sbr.rel (0) target = $region37
  $region36: #{critic_forward.1} parent=0 // pred_region
    _
  $region37: #{critic_forward.1} parent=0 // pred_fallthru
    _
  // Predicated region
  $region38: #{critic_forward.1} parent=0 // pred_check
    _
  $region39: #{critic_forward.1} parent=0 // pred_check_branch
    %863 = sbr.rel (0) target = $region41
  $region40: #{critic_forward.1} parent=0 // pred_region
    _
  $region41: #{critic_forward.1} parent=0 // pred_fallthru
    _

</llo_original>
